<compile_context>
chip_gen: v5e
topology: v5e:2x2
jax: 0.10.0
libtpu: 0.0.40
codegen_flags: <defaults>
</compile_context>

<pallas_src>
import jax
import jax.numpy as jnp
import numpy as np
from jax.experimental import pallas as pl
from jax.experimental.pallas import tpu as pltpu


def _locked_dropout_kernel(mask_ref, x_ref, o_ref):
    # mask_ref: (1, B*H)   -- same block every grid step ("locked" mask)
    # x_ref/o_ref: (TILE_T, B*H) tile; broadcast multiply over the seq tile.
    o_ref[...] = x_ref[...] * mask_ref[...]


def _choose_tile_t(T, row_bytes, target_bytes=2 * 1024 * 1024):
    """Pick a T-tile so each block is ~2 MiB (multiple of 8, or the full T)."""
    rows = target_bytes // max(1, row_bytes)
    rows = max(8, (rows // 8) * 8)
    return T if rows >= T else rows


def locked_dropout(x, key, dropout=0.5, training=True):
    """JAX wrapper mirroring LockedDropout.forward."""
    if (not training) or dropout == 0.0:
        return x
    if not (0.0 < dropout < 1.0):
        raise ValueError(f"dropout must be in [0, 1), got {dropout}")
    keep = 1.0 - dropout

    T, B, H = x.shape
    BH = B * H

    # Lane-dense layout: last dim (B*H) -> 128-lane axis, T -> sublane axis.
    x2 = x.reshape(T, BH)

    # Locked mask (one (1, B, H) draw, pre-scaled to {0, 1/keep}) in x's dtype.
    mask = (
        jax.random.bernoulli(key, p=keep, shape=(1, BH)).astype(x.dtype)
        * jnp.asarray(1.0 / keep, dtype=x.dtype)
    )

    itemsize = jnp.dtype(x.dtype).itemsize
    tile_t = _choose_tile_t(T, BH * itemsize)
    grid = (pl.cdiv(T, tile_t),)

    y2 = pl.pallas_call(
        _locked_dropout_kernel,
        out_shape=jax.ShapeDtypeStruct((T, BH), x.dtype),
        grid=grid,
        in_specs=[
            # Mask block is the whole (1, B*H) array, reused by every tile.
            pl.BlockSpec((1, BH), lambda i: (0, 0)),
            # x tile over the seq axis.
            pl.BlockSpec((tile_t, BH), lambda i: (i, 0)),
        ],
        out_specs=pl.BlockSpec((tile_t, BH), lambda i: (i, 0)),
        compiler_params=pltpu.CompilerParams(
            dimension_semantics=("parallel",),
        ),
    )(mask, x2)

    return y2.reshape(T, B, H)


if __name__ == "__main__":
    key = jax.random.PRNGKey(0)
    kx, kmask = jax.random.split(key)

    T, B, H = 8, 4, 32  # (seq, batch, hidden)
    x = jax.random.normal(kx, (T, B, H), dtype=jnp.float32)

    dropout = 0.5
    y = locked_dropout(x, kmask, dropout=dropout, training=True)
    y = jax.block_until_ready(y)

    # Sanity checks of LockedDropout semantics.
    assert y.shape == x.shape and y.dtype == x.dtype
    xn = np.asarray(x)
    yn = np.asarray(y)
    keep = 1.0 - dropout

    # Each output element is either 0 or x / keep.
    ratio = np.where(np.abs(xn) > 1e-6, yn / xn, 0.0)
    vals = ratio[np.abs(xn) > 1e-6]
    assert np.all(
        (np.abs(vals) < 1e-5) | (np.abs(vals - 1.0 / keep) < 1e-4)
    ), "output is not {0, x/keep}"

    # Mask is locked across the seq dimension.
    mask0 = (np.abs(yn[0]) > 1e-6) | (np.abs(xn[0]) <= 1e-6)
    for t in range(1, T):
        mt = (np.abs(yn[t]) > 1e-6) | (np.abs(xn[t]) <= 1e-6)
        assert np.array_equal(mask0, mt), "mask not locked across seq dim"

    # Eval / dropout=0 path returns x unchanged.
    y_eval = locked_dropout(x, kmask, dropout=dropout, training=False)
    assert np.array_equal(np.asarray(y_eval), xn)
    y_nodrop = locked_dropout(x, kmask, dropout=0.0, training=True)
    assert np.array_equal(np.asarray(y_nodrop), xn)

    print("KERNEL_OK")
</pallas_src>

<mosaic_0001>
module attributes {stable_mosaic.version = 11 : i64} {
  func.func @_locked_dropout_kernel(%arg0: i32, %arg1: memref<1x128xf32, #tpu.memory_space<vmem>>, %arg2: memref<8x128xf32, #tpu.memory_space<vmem>>, %arg3: memref<8x128xf32, #tpu.memory_space<vmem>>) attributes {dimension_semantics = [#tpu.dimension_semantics<parallel>], iteration_bounds = array<i64: 1>, scalar_prefetch = 0 : i64, scratch_operands = 0 : i64, tpu.core_type = #tpu.core_type<tc>, window_params = [{pipeline_mode = #tpu.pipeline_mode<synchronous>, transform_indices = @transform_0, window_bounds = array<i64: 1, 128>}, {transform_indices = @transform_1, window_bounds = array<i64: 8, 128>}, {transform_indices = @transform_2, window_bounds = array<i64: 8, 128>}]} {
    %c0 = arith.constant 0 : index
    %c0_0 = arith.constant 0 : index
    %0 = vector.load %arg2[%c0, %c0_0] : memref<8x128xf32, #tpu.memory_space<vmem>>, vector<8x128xf32>
    %c0_1 = arith.constant 0 : index
    %c0_2 = arith.constant 0 : index
    %1 = vector.load %arg1[%c0_1, %c0_2] : memref<1x128xf32, #tpu.memory_space<vmem>>, vector<1x128xf32>
    %2 = vector.broadcast %1 : vector<1x128xf32> to vector<8x128xf32>
    %3 = arith.mulf %0, %2 : vector<8x128xf32>
    %c0_3 = arith.constant 0 : index
    %c0_4 = arith.constant 0 : index
    %4 = vector.load %arg3[%c0_3, %c0_4] : memref<8x128xf32, #tpu.memory_space<vmem>>, vector<8x128xf32>
    tpu.vector_store %arg3[%c0_3, %c0_4], %3 {strides = array<i32>} : memref<8x128xf32, #tpu.memory_space<vmem>>, vector<8x128xf32>,
    return
  }
  func.func @transform_0(%arg0: i32) -> (i32, i32) {
    %c0_i32 = arith.constant 0 : i32
    %c0_i32_0 = arith.constant 0 : i32
    %c0_i32_1 = arith.constant 0 : i32
    return %c0_i32, %c0_i32_0 : i32, i32
  }
  func.func @transform_1(%arg0: i32) -> (i32, i32) {
    %c0_i32 = arith.constant 0 : i32
    %c0_i32_0 = arith.constant 0 : i32
    return %arg0, %c0_i32 : i32, i32
  }
  func.func @transform_2(%arg0: i32) -> (i32, i32) {
    %c0_i32 = arith.constant 0 : i32
    %c0_i32_0 = arith.constant 0 : i32
    return %arg0, %c0_i32 : i32, i32
  }
}

</mosaic_0001>

<llo_original>
// kernel: tpu_custom_call.1
$region0: #{tpu_custom_call.1}
  #allocation0 [shape = 'u32[]', space=smem, size = 0x4, offset = 0x4, fixed_abs, tag = 'smem constant byte address 0x4 - core index']
  #allocation1 [shape = 'u32[72,128]{1,0:T(1,128)}', space=vmem, size = 0x9000, scoped, tag = 'internal scratch']
  %s0 = inlined_call_operand.hbm [shape: f32[1,128], index: 0, kind: input, shape index: {}]
  %s1 = inlined_call_operand.hbm [shape: f32[8,128], index: 1, kind: input, shape index: {}]
  %s2 = inlined_call_operand.hbm [shape: f32[8,128], index: 2, kind: output, shape index: {}]
  %s3 = sld [smem:[#allocation0]]
  $region26: #{tpu_custom_call.1} parent=0
    _
  %s5 = ssub.s32 1, %s3
  %s6 = scalar_select 0, %s5, %s3
  $region1: #{tpu_custom_call.1} parent=0
    #allocation2 [shape = 'u8[512]{0}', space=vmem, size = 0x400, scoped, tag = 'input window, operand 0, single buffered']
    #allocation3 [shape = 's32[1]{0}', space=sflag, size = 0x4, scoped, tag = 'scoped memory for tpu_custom_call.1']
    #allocation4 [shape = 's32[1]{0}', space=sflag, size = 0x4, scoped, tag = 'scoped memory for tpu_custom_call.1']
    #allocation5 [shape = 'u8[4096]{0}', space=vmem, size = 0x1000, scoped, tag = 'input window, operand 1, single buffered']
    #allocation6 [shape = 's32[1]{0}', space=sflag, size = 0x4, scoped, tag = 'scoped memory for tpu_custom_call.1']
    #allocation7 [shape = 'u8[4096]{0}', space=vmem, size = 0x1000, scoped, tag = 'output window, operand 0, single buffered']
    %7 = vsyncpa [#allocation3], 0
    %8 = vsyncpa [#allocation6], 0
    %9 = vsyncpa [#allocation4], 0
    // Predicated region
    $region2: #{tpu_custom_call.1} parent=1 // pred_check
      _
    $region3: #{tpu_custom_call.1} parent=1 // pred_check_branch
      %11 = sbr.rel (0) target = $region5
    $region4: #{tpu_custom_call.1} parent=1 // pred_region
      %13 = vsyncadd [#allocation3], 0
      %s15 = sshll.u32 %s0, 4
      %s16 = int_to_ptr.hbm [resolvable:$true] %s15
      %s17 = sshll.u32 [#allocation2], 4
      %s18 = int_to_ptr.vmem [resolvable:$true] %s17
      %20 = dma.hbm_to_vmem [thread:$0]  %s16, 16, %s18, [#allocation3]
    $region5: #{tpu_custom_call.1} parent=1 // pred_fallthru
      _
    // Predicated region
    $region6: #{tpu_custom_call.1} parent=1 // pred_check
      _
    $region7: #{tpu_custom_call.1} parent=1 // pred_check_branch
      %22 = sbr.rel (0) target = $region9
    $region8: #{tpu_custom_call.1} parent=1 // pred_region
      %24 = vsyncadd [#allocation6], 0
      %s26 = sshll.u32 %s1, 4
      %s27 = int_to_ptr.hbm [resolvable:$true] %s26
      %s28 = sshll.u32 [#allocation5], 4
      %s29 = int_to_ptr.vmem [resolvable:$true] %s28
      %31 = dma.hbm_to_vmem [thread:$0]  %s27, 128, %s29, [#allocation6]
    $region9: #{tpu_custom_call.1} parent=1 // pred_fallthru
      _
    // Predicated region
    $region10: #{tpu_custom_call.1} parent=1 // pred_check
      _
    $region11: #{tpu_custom_call.1} parent=1 // pred_check_branch
      %33 = sbr.rel (0) target = $region13
    $region12: #{tpu_custom_call.1} parent=1 // pred_region
      %35 = dma.done [#allocation3], 16
    $region13: #{tpu_custom_call.1} parent=1 // pred_fallthru
      _
    // Predicated region
    $region14: #{tpu_custom_call.1} parent=1 // pred_check
      _
    $region15: #{tpu_custom_call.1} parent=1 // pred_check_branch
      %37 = sbr.rel (0) target = $region17
    $region16: #{tpu_custom_call.1} parent=1 // pred_region
      %39 = dma.done [#allocation6], 128
    $region17: #{tpu_custom_call.1} parent=1 // pred_fallthru
      _
    %v40 = vld [vmem:[#allocation5] sm:$0xff]
    %v41 = vld [vmem:[#allocation2] sm:$0x1]
    %v43 = vperm.slane %v41, 0
    %v45 = vmul.f32 %v40, %v43
    %46 = vst [vmem:[#allocation7] sm:$0xff] %v45
    // Predicated region
    $region18: #{tpu_custom_call.1} parent=1 // pred_check
      _
    $region19: #{tpu_custom_call.1} parent=1 // pred_check_branch
      %48 = sbr.rel (0) target = $region21
    $region20: #{tpu_custom_call.1} parent=1 // pred_region
      %50 = vsyncadd [#allocation4], 0
      %s52 = sshll.u32 [#allocation7], 4
      %s53 = int_to_ptr.vmem [resolvable:$true] %s52
      %s54 = sshll.u32 %s2, 4
      %s55 = int_to_ptr.hbm [resolvable:$true] %s54
      %57 = dma.vmem_to_hbm [thread:$0]  %s53, 128, %s55, [#allocation4]
    $region21: #{tpu_custom_call.1} parent=1 // pred_fallthru
      _
    // Predicated region
    $region22: #{tpu_custom_call.1} parent=1 // pred_check
      _
    $region23: #{tpu_custom_call.1} parent=1 // pred_check_branch
      %59 = sbr.rel (0) target = $region25
    $region24: #{tpu_custom_call.1} parent=1 // pred_region
      %61 = dma.done [#allocation4], 128
    $region25: #{tpu_custom_call.1} parent=1 // pred_fallthru
      _
    %62 = vsyncpa [#allocation3], 1
    %63 = vsyncpa [#allocation6], 1
    %64 = vsyncpa [#allocation4], 1

</llo_original>
